<compile_context>
chip_gen: v7x
topology: tpu7x:2x2x1
jax: 0.10.0
libtpu: 0.0.40
codegen_flags: <defaults>
</compile_context>

<pallas_src>
import jax
import jax.numpy as jnp
from jax.experimental import pallas as pl
from jax.experimental.pallas import tpu as pltpu

C1 = 0.01 ** 2
C2 = 0.03 ** 2

_VMEM_BUDGET = 8 * 1024 * 1024          # target per-step working set
_VMEM_LIMIT = 64 * 1024 * 1024          # explicit scoped-VMEM limit (> 32 MiB default)


def _planes_per_block(n_img, H, W):
    """Largest divisor B of n_img s.t. the (H, B*W) working set fits the budget
    and the lane block dim is either a multiple of 128 or the full folded width."""
    # ~16 f32 plane-equivalents live per step: x/y double-buffered (4), bf16 mask (1),
    # accumulator scratch (1), ~10 pooling / SSIM temporaries.
    per_plane = H * W * 4 * 16
    max_b = max(1, _VMEM_BUDGET // per_plane)
    candidates = [b for b in range(1, n_img + 1)
                  if n_img % b == 0 and (b == n_img or (b * W) % 128 == 0)]
    within = [b for b in candidates if b <= max_b]
    return max(within) if within else min(candidates)


def _build_kernel(H, TL, W):
    """Kernel over a (H, TL) block holding TL // W whole image planes folded
    along the lane axis (plane p occupies lanes [p*W, (p+1)*W))."""

    def kernel(x_ref, y_ref, m_ref, o_ref, acc_ref):
        step = pl.program_id(0)

        @pl.when(step == 0)
        def _init():
            acc_ref[...] = jnp.zeros_like(acc_ref)

        x = x_ref[...].astype(jnp.float32)      # (H, TL)
        y = y_ref[...].astype(jnp.float32)
        m = m_ref[...].astype(jnp.float32)      # 0.0 / 1.0

        # Boundary / reflect-source masks (hoisted once, reused by all 5 pools).
        row = jax.lax.broadcasted_iota(jnp.int32, (H, TL), 0)
        col = jax.lax.broadcasted_iota(jnp.int32, (H, TL), 1) % W
        row_bnd = jnp.logical_or(row == 0, row == H - 1)
        row_src = jnp.logical_or(row == 1, row == H - 2)
        col_bnd = jnp.logical_or(col == 0, col == W - 1)
        col_src = jnp.logical_or(col == 1, col == W - 2)

        def pool3(a, axis, size, is_bnd, is_src):
            # 3-tap sum along `axis` with a 1-element reflect border at the
            # image boundaries (rows: top/bottom; lanes: per-plane left/right).
            # Interior: a[i-1] + a[i] + a[i+1] via two opposite XLU rolls.
            # Boundary: a[i] + 2 * inward_neighbor, where the inward neighbor is
            # recovered by spreading the reflect-source line with both rolls
            # (direction-convention independent; cross-plane wrap contributes 0).
            n1 = pltpu.roll(a, shift=1, axis=axis)
            n2 = pltpu.roll(a, shift=size - 1, axis=axis)
            src = jnp.where(is_src, a, 0.0)
            fix = pltpu.roll(src, shift=1, axis=axis) + pltpu.roll(src, shift=size - 1, axis=axis)
            return a + jnp.where(is_bnd, 2.0 * fix, n1 + n2)

        def pool9(a):
            # Separable 3x3 reflect average pool: rows (sublanes) then columns (lanes).
            rp = pool3(a, axis=0, size=H, is_bnd=row_bnd, is_src=row_src)
            cp = pool3(rp, axis=1, size=TL, is_bnd=col_bnd, is_src=col_src)
            return cp * (1.0 / 9.0)

        mu_x = pool9(x)
        mu_y = pool9(y)
        sigma_x = pool9(x * x) - mu_x * mu_x
        sigma_y = pool9(y * y) - mu_y * mu_y
        sigma_xy = pool9(x * y) - mu_x * mu_y

        ssim_n = (2.0 * mu_x * mu_y + C1) * (2.0 * sigma_xy + C2)
        ssim_d = (mu_x * mu_x + mu_y * mu_y + C1) * (sigma_x + sigma_y + C2)
        # Divide via reciprocal (EUP path); approx=False keeps full f32 accuracy.
        val = jnp.clip((1.0 - ssim_n * pl.reciprocal(ssim_d, approx=False)) * 0.5, 0.0, 1.0)

        # Per-step: pure VALU accumulate, no reductions, no scalar RMW chain.
        acc_ref[...] += val * m

        @pl.when(step == pl.num_programs(0) - 1)
        def _finalize():
            o_ref[...] = jnp.sum(acc_ref[...]).reshape(1, 1)

    return kernel


def ssim_loss(x, y, mask):
    """x, y: (N, C, H, W) float; mask: (N, C, H, W) bool. Returns scalar loss
    equal to clamp((1 - SSIM_n/SSIM_d)/2, 0, 1)[mask].mean() of the torch module."""
    N, Cc, H, W = x.shape
    n_img = N * Cc
    if H < 3 or W < 3:
        raise ValueError("ssim_loss Pallas kernel requires H >= 3 and W >= 3")

    # Keep bf16 inputs in bf16 (half the HBM read bytes), otherwise use f32.
    in_dtype = jnp.bfloat16 if x.dtype == jnp.bfloat16 else jnp.float32

    def fold(a, dtype):
        # (N, C, H, W) -> (H, n_img * W): fold the image planes into the lane axis.
        a = a.reshape(n_img, H, W).astype(dtype)
        return jnp.transpose(a, (1, 0, 2)).reshape(H, n_img * W)

    xf = fold(x, in_dtype)
    yf = fold(y, in_dtype)
    mf = fold(mask, jnp.bfloat16)                       # 0/1 mask at half the bytes of f32

    # Masked-element count computed in the wrapper (exact integer count).
    cnt = jnp.sum(mask, dtype=jnp.int32).astype(jnp.float32)

    B = _planes_per_block(n_img, H, W)                  # planes per grid step
    TL = B * W                                          # lane-block width
    num_blocks = n_img // B

    kernel = _build_kernel(H, TL, W)

    def data_spec(deep_buffer):
        if deep_buffer and num_blocks >= 3:
            # 3-deep buffering on the two large streams to hide DMA jitter.
            return pl.BlockSpec((H, TL), lambda i: (0, i), pipeline_mode=pl.Buffered(3))
        return pl.BlockSpec((H, TL), lambda i: (0, i))

    grid_spec = pltpu.PrefetchScalarGridSpec(
        num_scalar_prefetch=0,
        grid=(num_blocks,),
        in_specs=[data_spec(True), data_spec(True), data_spec(False)],
        out_specs=pl.BlockSpec((1, 1), lambda i: (0, 0)),
        scratch_shapes=[pltpu.VMEM((H, TL), jnp.float32)],   # persistent accumulator
    )

    bytes_accessed = (xf.size * xf.dtype.itemsize
                      + yf.size * yf.dtype.itemsize
                      + mf.size * mf.dtype.itemsize + 4)
    cost = pl.CostEstimate(
        flops=70 * n_img * H * W,
        transcendentals=n_img * H * W,
        bytes_accessed=int(bytes_accessed),
    )

    msum = pl.pallas_call(
        kernel,
        out_shape=jax.ShapeDtypeStruct((1, 1), jnp.float32),
        grid_spec=grid_spec,
        compiler_params=pltpu.CompilerParams(
            dimension_semantics=("arbitrary",),     # reduction axis across plane groups
            vmem_limit_bytes=_VMEM_LIMIT,
        ),
        cost_estimate=cost,
    )(xf, yf, mf)

    # Mean over the masked elements (NaN if the mask is empty, like torch .mean()).
    return msum[0, 0] / cnt


def _ssim_loss_ref(x, y, mask):
    """Pure-JAX reference (mirrors the PyTorch module)."""
    xp = jnp.pad(x, ((0, 0), (0, 0), (1, 1), (1, 1)), mode="reflect").astype(jnp.float32)
    yp = jnp.pad(y, ((0, 0), (0, 0), (1, 1), (1, 1)), mode="reflect").astype(jnp.float32)

    def pool(a):
        return jax.lax.reduce_window(
            a, 0.0, jax.lax.add, (1, 1, 3, 3), (1, 1, 1, 1), "VALID"
        ) / 9.0

    mu_x = pool(xp)
    mu_y = pool(yp)
    sigma_x = pool(xp * xp) - mu_x ** 2
    sigma_y = pool(yp * yp) - mu_y ** 2
    sigma_xy = pool(xp * yp) - mu_x * mu_y
    n = (2 * mu_x * mu_y + C1) * (2 * sigma_xy + C2)
    d = (mu_x ** 2 + mu_y ** 2 + C1) * (sigma_x + sigma_y + C2)
    val = jnp.clip((1.0 - n / d) * 0.5, 0.0, 1.0)
    mf = mask.astype(jnp.float32)
    return jnp.sum(val * mf) / jnp.sum(mf)


if __name__ == "__main__":
    key = jax.random.PRNGKey(0)
    kx, ky, km = jax.random.split(key, 3)

    N, Cc, H, W = 2, 4, 16, 16
    x = jax.random.uniform(kx, (N, Cc, H, W), dtype=jnp.float32)
    y = jax.random.uniform(ky, (N, Cc, H, W), dtype=jnp.float32)
    mask = jax.random.uniform(km, (N, Cc, H, W)) > 0.3  # boolean mask

    out = jax.block_until_ready(ssim_loss(x, y, mask))

    ref = _ssim_loss_ref(x, y, mask)
    assert jnp.allclose(out, ref, atol=1e-5, rtol=1e-5), (out, ref)

    print("KERNEL_OK")
</pallas_src>

<mosaic_0001>
module attributes {stable_mosaic.version = 11 : i64} {
  func.func @kernel(%arg0: i32, %arg1: memref<16x128xf32, #tpu.memory_space<vmem>>, %arg2: memref<16x128xf32, #tpu.memory_space<vmem>>, %arg3: memref<16x128xbf16, #tpu.memory_space<vmem>>, %arg4: memref<1x1xf32, #tpu.memory_space<vmem>>, %arg5: memref<16x128xf32, #tpu.memory_space<vmem>>) attributes {dimension_semantics = [#tpu.dimension_semantics<arbitrary>], iteration_bounds = array<i64: 1>, scalar_prefetch = 0 : i64, scratch_operands = 1 : i64, tpu.core_type = #tpu.core_type<tc>, window_params = [{transform_indices = @transform_0, window_bounds = array<i64: 16, 128>}, {transform_indices = @transform_1, window_bounds = array<i64: 16, 128>}, {transform_indices = @transform_2, window_bounds = array<i64: 16, 128>}, {pipeline_mode = #tpu.pipeline_mode<synchronous>, transform_indices = @transform_3, window_bounds = array<i64: 1, 1>}]} {
    %c0_i32 = arith.constant 0 : i32
    %0 = arith.cmpi eq, %arg0, %c0_i32 : i32
    %1 = arith.extui %0 : i1 to i32
    %c0_i32_0 = arith.constant 0 : i32
    %2 = arith.cmpi ne, %1, %c0_i32_0 : i32
    scf.if %2 {
      %cst_95 = arith.constant 0.000000e+00 : f32
      %220 = vector.broadcast %cst_95 : f32 to vector<16x128xf32>
      %c0_96 = arith.constant 0 : index
      %c0_97 = arith.constant 0 : index
      %221 = vector.load %arg5[%c0_96, %c0_97] : memref<16x128xf32, #tpu.memory_space<vmem>>, vector<16x128xf32>
      tpu.vector_store %arg5[%c0_96, %c0_97], %220 {strides = array<i32>} : memref<16x128xf32, #tpu.memory_space<vmem>>, vector<16x128xf32>,
    } else {
    }
    %c0 = arith.constant 0 : index
    %c0_1 = arith.constant 0 : index
    %3 = vector.load %arg1[%c0, %c0_1] : memref<16x128xf32, #tpu.memory_space<vmem>>, vector<16x128xf32>
    %c0_2 = arith.constant 0 : index
    %c0_3 = arith.constant 0 : index
    %4 = vector.load %arg2[%c0_2, %c0_3] : memref<16x128xf32, #tpu.memory_space<vmem>>, vector<16x128xf32>
    %c0_4 = arith.constant 0 : index
    %c0_5 = arith.constant 0 : index
    %5 = vector.load %arg3[%c0_4, %c0_5] : memref<16x128xbf16, #tpu.memory_space<vmem>>, vector<16x128xbf16>
    %6 = arith.extf %5 : vector<16x128xbf16> to vector<16x128xf32>
    %7 = tpu.iota {dimensions = array<i32: 0>} : vector<16x128xi32>
    %8 = tpu.iota {dimensions = array<i32: 1>} : vector<16x128xi32>
    %c16_i32 = arith.constant 16 : i32
    %c0_i32_6 = arith.constant 0 : i32
    %9 = arith.cmpi eq, %c16_i32, %c0_i32_6 : i32
    %c1_i32 = arith.constant 1 : i32
    %10 = arith.select %9, %c1_i32, %c16_i32 : i32
    %11 = vector.broadcast %10 : i32 to vector<16x128xi32>
    %12 = arith.remsi %8, %11 : vector<16x128xi32>
    %c0_i32_7 = arith.constant 0 : i32
    %13 = vector.broadcast %c0_i32_7 : i32 to vector<16x128xi32>
    %14 = arith.cmpi ne, %12, %13 : vector<16x128xi32>
    %c0_i32_8 = arith.constant 0 : i32
    %15 = vector.broadcast %c0_i32_8 : i32 to vector<16x128xi32>
    %16 = arith.cmpi slt, %12, %15 : vector<16x128xi32>
    %c0_i32_9 = arith.constant 0 : i32
    %17 = arith.cmpi slt, %10, %c0_i32_9 : i32
    %18 = vector.broadcast %17 : i1 to vector<16x128xi1>
    %19 = vector.broadcast %18 : vector<16x128xi1> to vector<16x128xi1>
    %20 = arith.xori %16, %19 : vector<16x128xi1>
    %21 = arith.andi %20, %14 : vector<16x128xi1>
    %22 = vector.broadcast %10 : i32 to vector<16x128xi32>
    %23 = arith.addi %12, %22 : vector<16x128xi32>
    %24 = arith.select %21, %23, %12 : vector<16x128xi1>, vector<16x128xi32>
    %c0_i32_10 = arith.constant 0 : i32
    %25 = vector.broadcast %c0_i32_10 : i32 to vector<16x128xi32>
    %26 = arith.cmpi eq, %7, %25 : vector<16x128xi32>
    %c15_i32 = arith.constant 15 : i32
    %27 = vector.broadcast %c15_i32 : i32 to vector<16x128xi32>
    %28 = arith.cmpi eq, %7, %27 : vector<16x128xi32>
    %29 = arith.ori %26, %28 : vector<16x128xi1>
    %c1_i32_11 = arith.constant 1 : i32
    %30 = vector.broadcast %c1_i32_11 : i32 to vector<16x128xi32>
    %31 = arith.cmpi eq, %7, %30 : vector<16x128xi32>
    %c14_i32 = arith.constant 14 : i32
    %32 = vector.broadcast %c14_i32 : i32 to vector<16x128xi32>
    %33 = arith.cmpi eq, %7, %32 : vector<16x128xi32>
    %34 = arith.ori %31, %33 : vector<16x128xi1>
    %c0_i32_12 = arith.constant 0 : i32
    %35 = vector.broadcast %c0_i32_12 : i32 to vector<16x128xi32>
    %36 = arith.cmpi eq, %24, %35 : vector<16x128xi32>
    %c15_i32_13 = arith.constant 15 : i32
    %37 = vector.broadcast %c15_i32_13 : i32 to vector<16x128xi32>
    %38 = arith.cmpi eq, %24, %37 : vector<16x128xi32>
    %39 = arith.ori %36, %38 : vector<16x128xi1>
    %c1_i32_14 = arith.constant 1 : i32
    %40 = vector.broadcast %c1_i32_14 : i32 to vector<16x128xi32>
    %41 = arith.cmpi eq, %24, %40 : vector<16x128xi32>
    %c14_i32_15 = arith.constant 14 : i32
    %42 = vector.broadcast %c14_i32_15 : i32 to vector<16x128xi32>
    %43 = arith.cmpi eq, %24, %42 : vector<16x128xi32>
    %44 = arith.ori %41, %43 : vector<16x128xi1>
    %c1_i32_16 = arith.constant 1 : i32
    %45 = tpu.dynamic_rotate %3 by %c1_i32_16 dim 0 : vector<16x128xf32>, i32 -> vector<16x128xf32>
    %c15_i32_17 = arith.constant 15 : i32
    %46 = tpu.dynamic_rotate %3 by %c15_i32_17 dim 0 : vector<16x128xf32>, i32 -> vector<16x128xf32>
    %cst = arith.constant 0.000000e+00 : f32
    %47 = vector.broadcast %cst : f32 to vector<16x128xf32>
    %48 = arith.select %34, %3, %47 : vector<16x128xi1>, vector<16x128xf32>
    %c1_i32_18 = arith.constant 1 : i32
    %49 = tpu.dynamic_rotate %48 by %c1_i32_18 dim 0 : vector<16x128xf32>, i32 -> vector<16x128xf32>
    %c15_i32_19 = arith.constant 15 : i32
    %50 = tpu.dynamic_rotate %48 by %c15_i32_19 dim 0 : vector<16x128xf32>, i32 -> vector<16x128xf32>
    %51 = arith.addf %49, %50 : vector<16x128xf32>
    %cst_20 = arith.constant 2.000000e+00 : f32
    %52 = vector.broadcast %cst_20 : f32 to vector<16x128xf32>
    %53 = arith.mulf %52, %51 : vector<16x128xf32>
    %54 = arith.addf %45, %46 : vector<16x128xf32>
    %55 = arith.select %29, %53, %54 : vector<16x128xi1>, vector<16x128xf32>
    %56 = arith.addf %3, %55 : vector<16x128xf32>
    %c1_i32_21 = arith.constant 1 : i32
    %57 = tpu.dynamic_rotate %56 by %c1_i32_21 dim 1 : vector<16x128xf32>, i32 -> vector<16x128xf32>
    %c127_i32 = arith.constant 127 : i32
    %58 = tpu.dynamic_rotate %56 by %c127_i32 dim 1 : vector<16x128xf32>, i32 -> vector<16x128xf32>
    %cst_22 = arith.constant 0.000000e+00 : f32
    %59 = vector.broadcast %cst_22 : f32 to vector<16x128xf32>
    %60 = arith.select %44, %56, %59 : vector<16x128xi1>, vector<16x128xf32>
    %c1_i32_23 = arith.constant 1 : i32
    %61 = tpu.dynamic_rotate %60 by %c1_i32_23 dim 1 : vector<16x128xf32>, i32 -> vector<16x128xf32>
    %c127_i32_24 = arith.constant 127 : i32
    %62 = tpu.dynamic_rotate %60 by %c127_i32_24 dim 1 : vector<16x128xf32>, i32 -> vector<16x128xf32>
    %63 = arith.addf %61, %62 : vector<16x128xf32>
    %cst_25 = arith.constant 2.000000e+00 : f32
    %64 = vector.broadcast %cst_25 : f32 to vector<16x128xf32>
    %65 = arith.mulf %64, %63 : vector<16x128xf32>
    %66 = arith.addf %57, %58 : vector<16x128xf32>
    %67 = arith.select %39, %65, %66 : vector<16x128xi1>, vector<16x128xf32>
    %68 = arith.addf %56, %67 : vector<16x128xf32>
    %cst_26 = arith.constant 0.111111112 : f32
    %69 = vector.broadcast %cst_26 : f32 to vector<16x128xf32>
    %70 = arith.mulf %68, %69 : vector<16x128xf32>
    %c1_i32_27 = arith.constant 1 : i32
    %71 = tpu.dynamic_rotate %4 by %c1_i32_27 dim 0 : vector<16x128xf32>, i32 -> vector<16x128xf32>
    %c15_i32_28 = arith.constant 15 : i32
    %72 = tpu.dynamic_rotate %4 by %c15_i32_28 dim 0 : vector<16x128xf32>, i32 -> vector<16x128xf32>
    %cst_29 = arith.constant 0.000000e+00 : f32
    %73 = vector.broadcast %cst_29 : f32 to vector<16x128xf32>
    %74 = arith.select %34, %4, %73 : vector<16x128xi1>, vector<16x128xf32>
    %c1_i32_30 = arith.constant 1 : i32
    %75 = tpu.dynamic_rotate %74 by %c1_i32_30 dim 0 : vector<16x128xf32>, i32 -> vector<16x128xf32>
    %c15_i32_31 = arith.constant 15 : i32
    %76 = tpu.dynamic_rotate %74 by %c15_i32_31 dim 0 : vector<16x128xf32>, i32 -> vector<16x128xf32>
    %77 = arith.addf %75, %76 : vector<16x128xf32>
    %cst_32 = arith.constant 2.000000e+00 : f32
    %78 = vector.broadcast %cst_32 : f32 to vector<16x128xf32>
    %79 = arith.mulf %78, %77 : vector<16x128xf32>
    %80 = arith.addf %71, %72 : vector<16x128xf32>
    %81 = arith.select %29, %79, %80 : vector<16x128xi1>, vector<16x128xf32>
    %82 = arith.addf %4, %81 : vector<16x128xf32>
    %c1_i32_33 = arith.constant 1 : i32
    %83 = tpu.dynamic_rotate %82 by %c1_i32_33 dim 1 : vector<16x128xf32>, i32 -> vector<16x128xf32>
    %c127_i32_34 = arith.constant 127 : i32
    %84 = tpu.dynamic_rotate %82 by %c127_i32_34 dim 1 : vector<16x128xf32>, i32 -> vector<16x128xf32>
    %cst_35 = arith.constant 0.000000e+00 : f32
    %85 = vector.broadcast %cst_35 : f32 to vector<16x128xf32>
    %86 = arith.select %44, %82, %85 : vector<16x128xi1>, vector<16x128xf32>
    %c1_i32_36 = arith.constant 1 : i32
    %87 = tpu.dynamic_rotate %86 by %c1_i32_36 dim 1 : vector<16x128xf32>, i32 -> vector<16x128xf32>
    %c127_i32_37 = arith.constant 127 : i32
    %88 = tpu.dynamic_rotate %86 by %c127_i32_37 dim 1 : vector<16x128xf32>, i32 -> vector<16x128xf32>
    %89 = arith.addf %87, %88 : vector<16x128xf32>
    %cst_38 = arith.constant 2.000000e+00 : f32
    %90 = vector.broadcast %cst_38 : f32 to vector<16x128xf32>
    %91 = arith.mulf %90, %89 : vector<16x128xf32>
    %92 = arith.addf %83, %84 : vector<16x128xf32>
    %93 = arith.select %39, %91, %92 : vector<16x128xi1>, vector<16x128xf32>
    %94 = arith.addf %82, %93 : vector<16x128xf32>
    %cst_39 = arith.constant 0.111111112 : f32
    %95 = vector.broadcast %cst_39 : f32 to vector<16x128xf32>
    %96 = arith.mulf %94, %95 : vector<16x128xf32>
    %97 = arith.mulf %3, %3 : vector<16x128xf32>
    %c1_i32_40 = arith.constant 1 : i32
    %98 = tpu.dynamic_rotate %97 by %c1_i32_40 dim 0 : vector<16x128xf32>, i32 -> vector<16x128xf32>
    %c15_i32_41 = arith.constant 15 : i32
    %99 = tpu.dynamic_rotate %97 by %c15_i32_41 dim 0 : vector<16x128xf32>, i32 -> vector<16x128xf32>
    %cst_42 = arith.constant 0.000000e+00 : f32
    %100 = vector.broadcast %cst_42 : f32 to vector<16x128xf32>
    %101 = arith.select %34, %97, %100 : vector<16x128xi1>, vector<16x128xf32>
    %c1_i32_43 = arith.constant 1 : i32
    %102 = tpu.dynamic_rotate %101 by %c1_i32_43 dim 0 : vector<16x128xf32>, i32 -> vector<16x128xf32>
    %c15_i32_44 = arith.constant 15 : i32
    %103 = tpu.dynamic_rotate %101 by %c15_i32_44 dim 0 : vector<16x128xf32>, i32 -> vector<16x128xf32>
    %104 = arith.addf %102, %103 : vector<16x128xf32>
    %cst_45 = arith.constant 2.000000e+00 : f32
    %105 = vector.broadcast %cst_45 : f32 to vector<16x128xf32>
    %106 = arith.mulf %105, %104 : vector<16x128xf32>
    %107 = arith.addf %98, %99 : vector<16x128xf32>
    %108 = arith.select %29, %106, %107 : vector<16x128xi1>, vector<16x128xf32>
    %109 = arith.addf %97, %108 : vector<16x128xf32>
    %c1_i32_46 = arith.constant 1 : i32
    %110 = tpu.dynamic_rotate %109 by %c1_i32_46 dim 1 : vector<16x128xf32>, i32 -> vector<16x128xf32>
    %c127_i32_47 = arith.constant 127 : i32
    %111 = tpu.dynamic_rotate %109 by %c127_i32_47 dim 1 : vector<16x128xf32>, i32 -> vector<16x128xf32>
    %cst_48 = arith.constant 0.000000e+00 : f32
    %112 = vector.broadcast %cst_48 : f32 to vector<16x128xf32>
    %113 = arith.select %44, %109, %112 : vector<16x128xi1>, vector<16x128xf32>
    %c1_i32_49 = arith.constant 1 : i32
    %114 = tpu.dynamic_rotate %113 by %c1_i32_49 dim 1 : vector<16x128xf32>, i32 -> vector<16x128xf32>
    %c127_i32_50 = arith.constant 127 : i32
    %115 = tpu.dynamic_rotate %113 by %c127_i32_50 dim 1 : vector<16x128xf32>, i32 -> vector<16x128xf32>
    %116 = arith.addf %114, %115 : vector<16x128xf32>
    %cst_51 = arith.constant 2.000000e+00 : f32
    %117 = vector.broadcast %cst_51 : f32 to vector<16x128xf32>
    %118 = arith.mulf %117, %116 : vector<16x128xf32>
    %119 = arith.addf %110, %111 : vector<16x128xf32>
    %120 = arith.select %39, %118, %119 : vector<16x128xi1>, vector<16x128xf32>
    %121 = arith.addf %109, %120 : vector<16x128xf32>
    %cst_52 = arith.constant 0.111111112 : f32
    %122 = vector.broadcast %cst_52 : f32 to vector<16x128xf32>
    %123 = arith.mulf %121, %122 : vector<16x128xf32>
    %124 = arith.mulf %70, %70 : vector<16x128xf32>
    %125 = arith.subf %123, %124 : vector<16x128xf32>
    %126 = arith.mulf %4, %4 : vector<16x128xf32>
    %c1_i32_53 = arith.constant 1 : i32
    %127 = tpu.dynamic_rotate %126 by %c1_i32_53 dim 0 : vector<16x128xf32>, i32 -> vector<16x128xf32>
    %c15_i32_54 = arith.constant 15 : i32
    %128 = tpu.dynamic_rotate %126 by %c15_i32_54 dim 0 : vector<16x128xf32>, i32 -> vector<16x128xf32>
    %cst_55 = arith.constant 0.000000e+00 : f32
    %129 = vector.broadcast %cst_55 : f32 to vector<16x128xf32>
    %130 = arith.select %34, %126, %129 : vector<16x128xi1>, vector<16x128xf32>
    %c1_i32_56 = arith.constant 1 : i32
    %131 = tpu.dynamic_rotate %130 by %c1_i32_56 dim 0 : vector<16x128xf32>, i32 -> vector<16x128xf32>
    %c15_i32_57 = arith.constant 15 : i32
    %132 = tpu.dynamic_rotate %130 by %c15_i32_57 dim 0 : vector<16x128xf32>, i32 -> vector<16x128xf32>
    %133 = arith.addf %131, %132 : vector<16x128xf32>
    %cst_58 = arith.constant 2.000000e+00 : f32
    %134 = vector.broadcast %cst_58 : f32 to vector<16x128xf32>
    %135 = arith.mulf %134, %133 : vector<16x128xf32>
    %136 = arith.addf %127, %128 : vector<16x128xf32>
    %137 = arith.select %29, %135, %136 : vector<16x128xi1>, vector<16x128xf32>
    %138 = arith.addf %126, %137 : vector<16x128xf32>
    %c1_i32_59 = arith.constant 1 : i32
    %139 = tpu.dynamic_rotate %138 by %c1_i32_59 dim 1 : vector<16x128xf32>, i32 -> vector<16x128xf32>
    %c127_i32_60 = arith.constant 127 : i32
    %140 = tpu.dynamic_rotate %138 by %c127_i32_60 dim 1 : vector<16x128xf32>, i32 -> vector<16x128xf32>
    %cst_61 = arith.constant 0.000000e+00 : f32
    %141 = vector.broadcast %cst_61 : f32 to vector<16x128xf32>
    %142 = arith.select %44, %138, %141 : vector<16x128xi1>, vector<16x128xf32>
    %c1_i32_62 = arith.constant 1 : i32
    %143 = tpu.dynamic_rotate %142 by %c1_i32_62 dim 1 : vector<16x128xf32>, i32 -> vector<16x128xf32>
    %c127_i32_63 = arith.constant 127 : i32
    %144 = tpu.dynamic_rotate %142 by %c127_i32_63 dim 1 : vector<16x128xf32>, i32 -> vector<16x128xf32>
    %145 = arith.addf %143, %144 : vector<16x128xf32>
    %cst_64 = arith.constant 2.000000e+00 : f32
    %146 = vector.broadcast %cst_64 : f32 to vector<16x128xf32>
    %147 = arith.mulf %146, %145 : vector<16x128xf32>
    %148 = arith.addf %139, %140 : vector<16x128xf32>
    %149 = arith.select %39, %147, %148 : vector<16x128xi1>, vector<16x128xf32>
    %150 = arith.addf %138, %149 : vector<16x128xf32>
    %cst_65 = arith.constant 0.111111112 : f32
    %151 = vector.broadcast %cst_65 : f32 to vector<16x128xf32>
    %152 = arith.mulf %150, %151 : vector<16x128xf32>
    %153 = arith.mulf %96, %96 : vector<16x128xf32>
    %154 = arith.subf %152, %153 : vector<16x128xf32>
    %155 = arith.mulf %3, %4 : vector<16x128xf32>
    %c1_i32_66 = arith.constant 1 : i32
    %156 = tpu.dynamic_rotate %155 by %c1_i32_66 dim 0 : vector<16x128xf32>, i32 -> vector<16x128xf32>
    %c15_i32_67 = arith.constant 15 : i32
    %157 = tpu.dynamic_rotate %155 by %c15_i32_67 dim 0 : vector<16x128xf32>, i32 -> vector<16x128xf32>
    %cst_68 = arith.constant 0.000000e+00 : f32
    %158 = vector.broadcast %cst_68 : f32 to vector<16x128xf32>
    %159 = arith.select %34, %155, %158 : vector<16x128xi1>, vector<16x128xf32>
    %c1_i32_69 = arith.constant 1 : i32
    %160 = tpu.dynamic_rotate %159 by %c1_i32_69 dim 0 : vector<16x128xf32>, i32 -> vector<16x128xf32>
    %c15_i32_70 = arith.constant 15 : i32
    %161 = tpu.dynamic_rotate %159 by %c15_i32_70 dim 0 : vector<16x128xf32>, i32 -> vector<16x128xf32>
    %162 = arith.addf %160, %161 : vector<16x128xf32>
    %cst_71 = arith.constant 2.000000e+00 : f32
    %163 = vector.broadcast %cst_71 : f32 to vector<16x128xf32>
    %164 = arith.mulf %163, %162 : vector<16x128xf32>
    %165 = arith.addf %156, %157 : vector<16x128xf32>
    %166 = arith.select %29, %164, %165 : vector<16x128xi1>, vector<16x128xf32>
    %167 = arith.addf %155, %166 : vector<16x128xf32>
    %c1_i32_72 = arith.constant 1 : i32
    %168 = tpu.dynamic_rotate %167 by %c1_i32_72 dim 1 : vector<16x128xf32>, i32 -> vector<16x128xf32>
    %c127_i32_73 = arith.constant 127 : i32
    %169 = tpu.dynamic_rotate %167 by %c127_i32_73 dim 1 : vector<16x128xf32>, i32 -> vector<16x128xf32>
    %cst_74 = arith.constant 0.000000e+00 : f32
    %170 = vector.broadcast %cst_74 : f32 to vector<16x128xf32>
    %171 = arith.select %44, %167, %170 : vector<16x128xi1>, vector<16x128xf32>
    %c1_i32_75 = arith.constant 1 : i32
    %172 = tpu.dynamic_rotate %171 by %c1_i32_75 dim 1 : vector<16x128xf32>, i32 -> vector<16x128xf32>
    %c127_i32_76 = arith.constant 127 : i32
    %173 = tpu.dynamic_rotate %171 by %c127_i32_76 dim 1 : vector<16x128xf32>, i32 -> vector<16x128xf32>
    %174 = arith.addf %172, %173 : vector<16x128xf32>
    %cst_77 = arith.constant 2.000000e+00 : f32
    %175 = vector.broadcast %cst_77 : f32 to vector<16x128xf32>
    %176 = arith.mulf %175, %174 : vector<16x128xf32>
    %177 = arith.addf %168, %169 : vector<16x128xf32>
    %178 = arith.select %39, %176, %177 : vector<16x128xi1>, vector<16x128xf32>
    %179 = arith.addf %167, %178 : vector<16x128xf32>
    %cst_78 = arith.constant 0.111111112 : f32
    %180 = vector.broadcast %cst_78 : f32 to vector<16x128xf32>
    %181 = arith.mulf %179, %180 : vector<16x128xf32>
    %182 = arith.mulf %70, %96 : vector<16x128xf32>
    %183 = arith.subf %181, %182 : vector<16x128xf32>
    %cst_79 = arith.constant 2.000000e+00 : f32
    %184 = vector.broadcast %cst_79 : f32 to vector<16x128xf32>
    %185 = arith.mulf %184, %70 : vector<16x128xf32>
    %186 = arith.mulf %185, %96 : vector<16x128xf32>
    %cst_80 = arith.constant 9.99999974E-5 : f32
    %187 = vector.broadcast %cst_80 : f32 to vector<16x128xf32>
    %188 = arith.addf %186, %187 : vector<16x128xf32>
    %cst_81 = arith.constant 2.000000e+00 : f32
    %189 = vector.broadcast %cst_81 : f32 to vector<16x128xf32>
    %190 = arith.mulf %189, %183 : vector<16x128xf32>
    %cst_82 = arith.constant 8.99999984E-4 : f32
    %191 = vector.broadcast %cst_82 : f32 to vector<16x128xf32>
    %192 = arith.addf %190, %191 : vector<16x128xf32>
    %193 = arith.mulf %188, %192 : vector<16x128xf32>
    %194 = arith.mulf %70, %70 : vector<16x128xf32>
    %195 = arith.mulf %96, %96 : vector<16x128xf32>
    %196 = arith.addf %194, %195 : vector<16x128xf32>
    %cst_83 = arith.constant 9.99999974E-5 : f32
    %197 = vector.broadcast %cst_83 : f32 to vector<16x128xf32>
    %198 = arith.addf %196, %197 : vector<16x128xf32>
    %199 = arith.addf %125, %154 : vector<16x128xf32>
    %cst_84 = arith.constant 8.99999984E-4 : f32
    %200 = vector.broadcast %cst_84 : f32 to vector<16x128xf32>
    %201 = arith.addf %199, %200 : vector<16x128xf32>
    %202 = arith.mulf %198, %201 : vector<16x128xf32>
    %203 = tpu.reciprocal %202 : vector<16x128xf32> -> vector<16x128xf32>
    %204 = arith.mulf %193, %203 : vector<16x128xf32>
    %cst_85 = arith.constant 1.000000e+00 : f32
    %205 = vector.broadcast %cst_85 : f32 to vector<16x128xf32>
    %206 = arith.subf %205, %204 : vector<16x128xf32>
    %cst_86 = arith.constant 5.000000e-01 : f32
    %207 = vector.broadcast %cst_86 : f32 to vector<16x128xf32>
    %208 = arith.mulf %206, %207 : vector<16x128xf32>
    %cst_87 = arith.constant 0.000000e+00 : f32
    %cst_88 = arith.constant 1.000000e+00 : f32
    %209 = vector.broadcast %cst_87 : f32 to vector<16x128xf32>
    %210 = arith.maximumf %209, %208 : vector<16x128xf32>
    %211 = vector.broadcast %cst_88 : f32 to vector<16x128xf32>
    %212 = arith.minimumf %211, %210 : vector<16x128xf32>
    %c0_89 = arith.constant 0 : index
    %c0_90 = arith.constant 0 : index
    %213 = vector.load %arg5[%c0_89, %c0_90] : memref<16x128xf32, #tpu.memory_space<vmem>>, vector<16x128xf32>
    %214 = arith.mulf %212, %6 : vector<16x128xf32>
    %215 = arith.addf %213, %214 : vector<16x128xf32>
    %c0_91 = arith.constant 0 : index
    %c0_92 = arith.constant 0 : index
    %216 = vector.load %arg5[%c0_91, %c0_92] : memref<16x128xf32, #tpu.memory_space<vmem>>, vector<16x128xf32>
    tpu.vector_store %arg5[%c0_91, %c0_92], %215 {strides = array<i32>} : memref<16x128xf32, #tpu.memory_space<vmem>>, vector<16x128xf32>,
    %c0_i32_93 = arith.constant 0 : i32
    %217 = arith.cmpi eq, %arg0, %c0_i32_93 : i32
    %218 = arith.extui %217 : i1 to i32
    %c0_i32_94 = arith.constant 0 : i32
    %219 = arith.cmpi ne, %218, %c0_i32_94 : i32
    scf.if %219 {
      %c0_95 = arith.constant 0 : index
      %c0_96 = arith.constant 0 : index
      %220 = vector.load %arg5[%c0_95, %c0_96] : memref<16x128xf32, #tpu.memory_space<vmem>>, vector<16x128xf32>
      %221 = vector.shape_cast %220 : vector<16x128xf32> to vector<1x16x128xf32>
      %cst_97 = arith.constant dense<0.000000e+00> : vector<1xf32>
      %222 = vector.multi_reduction <add>, %221, %cst_97 [1, 2] : vector<1x16x128xf32> to vector<1xf32>
      %223 = vector.shape_cast %222 : vector<1xf32> to vector<1x1x1xf32>
      %224 = vector.extract %223[0, 0, 0] : f32 from vector<1x1x1xf32>
      %225 = vector.broadcast %224 : f32 to vector<1x1xf32>
      %c0_98 = arith.constant 0 : index
      %c0_99 = arith.constant 0 : index
      %226 = vector.load %arg4[%c0_98, %c0_99] : memref<1x1xf32, #tpu.memory_space<vmem>>, vector<1x1xf32>
      tpu.vector_store %arg4[%c0_98, %c0_99], %225 {strides = array<i32>} : memref<1x1xf32, #tpu.memory_space<vmem>>, vector<1x1xf32>,
    } else {
    }
    return
  }
  func.func @transform_0(%arg0: i32) -> (i32, i32) {
    %c0_i32 = arith.constant 0 : i32
    %c0_i32_0 = arith.constant 0 : i32
    return %c0_i32, %arg0 : i32, i32
  }
  func.func @transform_1(%arg0: i32) -> (i32, i32) {
    %c0_i32 = arith.constant 0 : i32
    %c0_i32_0 = arith.constant 0 : i32
    return %c0_i32, %arg0 : i32, i32
  }
  func.func @transform_2(%arg0: i32) -> (i32, i32) {
    %c0_i32 = arith.constant 0 : i32
    %c0_i32_0 = arith.constant 0 : i32
    return %c0_i32, %arg0 : i32, i32
  }
  func.func @transform_3(%arg0: i32) -> (i32, i32) {
    %c0_i32 = arith.constant 0 : i32
    %c0_i32_0 = arith.constant 0 : i32
    %c0_i32_1 = arith.constant 0 : i32
    return %c0_i32, %c0_i32_0 : i32, i32
  }
}

</mosaic_0001>

<llo_original>
// kernel: tpu_custom_call.1
$region0: #{tpu_custom_call.1}
  #allocation0 [shape = 'u32[]', space=smem, size = 0x4, offset = 0x4, fixed_abs, tag = 'smem constant byte address 0x4 - core index']
  #allocation1 [shape = 'u32[144,128]{1,0:T(1,128)}', space=vmem, size = 0x12000, scoped, tag = 'internal scratch']
  #allocation2 [shape = 'f32[16,128]{1,0:T(8,128)}', space=vmem, size = 0x2000, scoped, tag = 'scratch operand']
  %s0 = inlined_call_operand.hbm [shape: f32[16,128], index: 0, kind: input, shape index: {}]
  %s1 = inlined_call_operand.hbm [shape: f32[16,128], index: 1, kind: input, shape index: {}]
  %s2 = inlined_call_operand.hbm [shape: bf16[16,128], index: 2, kind: input, shape index: {}]
  %s3 = inlined_call_operand.hbm [shape: f32[1,1], index: 3, kind: output, shape index: {}]
  %s4 = sld [smem:[#allocation0]]
  $region42: #{tpu_custom_call.1} parent=0
    _
  %s6 = ssub.s32 1, %s4
  %s7 = scalar_select 0, %s6, %s4
  $region1: #{tpu_custom_call.1} parent=0
    #allocation3 [shape = 'u8[8192]{0}', space=vmem, size = 0x2000, scoped, tag = 'input window, operand 0, single buffered']
    #allocation4 [shape = 's32[1]{0}', space=sflag, size = 0x4, scoped, tag = 'scoped memory for tpu_custom_call.1']
    #allocation5 [shape = 's32[1]{0}', space=sflag, size = 0x4, scoped, tag = 'scoped memory for tpu_custom_call.1']
    #allocation6 [shape = 'u8[8192]{0}', space=vmem, size = 0x2000, scoped, tag = 'input window, operand 1, single buffered']
    #allocation7 [shape = 's32[1]{0}', space=sflag, size = 0x4, scoped, tag = 'scoped memory for tpu_custom_call.1']
    #allocation8 [shape = 'u8[4096]{0}', space=vmem, size = 0x1000, scoped, tag = 'input window, operand 2, single buffered']
    #allocation9 [shape = 'u8[512]{0}', space=vmem, size = 0x400, scoped, tag = 'output window, operand 0, single buffered']
    %8 = vsyncpa [#allocation4], 0
    %9 = vsyncpa [#allocation7], 0
    %10 = vsyncpa [#allocation5], 0
    // Predicated region
    $region2: #{tpu_custom_call.1} parent=1 // pred_check
      _
    $region3: #{tpu_custom_call.1} parent=1 // pred_check_branch
      %12 = sbr.rel (0) target = $region5
    $region4: #{tpu_custom_call.1} parent=1 // pred_region
      %s14 = ssub.s32 256, 256
      %15 = vsyncadd [#allocation4], %s14
      %s16 = sshll.u32 [#allocation3], 4
      %s17 = int_to_ptr.vmem [resolvable:$true] %s16
      %22 = dma.hbm_to_vmem [thread:$0]  %s0, 256, %s17, [#allocation4], 128, 128, 8
    $region5: #{tpu_custom_call.1} parent=1 // pred_fallthru
      _
    // Predicated region
    $region6: #{tpu_custom_call.1} parent=1 // pred_check
      _
    $region7: #{tpu_custom_call.1} parent=1 // pred_check_branch
      %24 = sbr.rel (0) target = $region9
    $region8: #{tpu_custom_call.1} parent=1 // pred_region
      %s26 = ssub.s32 256, 256
      %27 = vsyncadd [#allocation7], %s26
      %s28 = sshll.u32 [#allocation6], 4
      %s29 = int_to_ptr.vmem [resolvable:$true] %s28
      %34 = dma.hbm_to_vmem [thread:$0]  %s1, 256, %s29, [#allocation7], 128, 128, 8
    $region9: #{tpu_custom_call.1} parent=1 // pred_fallthru
      _
    // Predicated region
    $region10: #{tpu_custom_call.1} parent=1 // pred_check
      _
    $region11: #{tpu_custom_call.1} parent=1 // pred_check_branch
      %36 = sbr.rel (0) target = $region13
    $region12: #{tpu_custom_call.1} parent=1 // pred_region
      %s38 = ssub.s32 128, 128
      %39 = vsyncadd [#allocation7], %s38
      %s40 = sshll.u32 [#allocation8], 4
      %s41 = int_to_ptr.vmem [resolvable:$true] %s40
      %46 = dma.hbm_to_vmem [thread:$0]  %s2, 128, %s41, [#allocation7], 64, 64, 4
    $region13: #{tpu_custom_call.1} parent=1 // pred_fallthru
      _
    // Predicated region
    $region14: #{tpu_custom_call.1} parent=1 // pred_check
      _
    $region15: #{tpu_custom_call.1} parent=1 // pred_check_branch
      %48 = sbr.rel (0) target = $region17
    $region16: #{tpu_custom_call.1} parent=1 // pred_region
      %49 = dma.done [#allocation4], 256
    $region17: #{tpu_custom_call.1} parent=1 // pred_fallthru
      _
    // Predicated region
    $region18: #{tpu_custom_call.1} parent=1 // pred_check
      _
    $region19: #{tpu_custom_call.1} parent=1 // pred_check_branch
      %51 = sbr.rel (0) target = $region21
    $region20: #{tpu_custom_call.1} parent=1 // pred_region
      %52 = dma.done [#allocation7], 256
    $region21: #{tpu_custom_call.1} parent=1 // pred_fallthru
      _
    // Predicated region
    $region22: #{tpu_custom_call.1} parent=1 // pred_check
      _
    $region23: #{tpu_custom_call.1} parent=1 // pred_check_branch
      %54 = sbr.rel (0) target = $region25
    $region24: #{tpu_custom_call.1} parent=1 // pred_region
      %55 = dma.done [#allocation7], 128
    $region25: #{tpu_custom_call.1} parent=1 // pred_fallthru
      _
    %p56 = scmp.eq.s32.totalorder 0, 0
    // Predicated region
    $region26: #{tpu_custom_call.1} parent=1 // pred_check
      %p57 = pneg %p56
    $region27: #{tpu_custom_call.1} parent=1 // pred_check_branch
      %59 = sbr.rel (%p57) target = $region29
    $region28: #{tpu_custom_call.1} parent=1 // pred_region
      %60 = vst [vmem:[#allocation2] sm:$0xff] 0.0
      %61 = vst [vmem:[#allocation2 + $0x8] sm:$0xff] 0.0
    $region29: #{tpu_custom_call.1} parent=1 // pred_fallthru
      _
    %v62 = vld [vmem:[#allocation3] sm:$0xff]
    %v63 = vld [vmem:[#allocation3 + $0x8] sm:$0xff]
    %v64 = vld [vmem:[#allocation6] sm:$0xff]
    %v65 = vld [vmem:[#allocation6 + $0x8] sm:$0xff]
    %v66 = vld [vmem:[#allocation8] sm:$0xf]
    %v67 = vld [vmem:[#allocation8 + $0x4] sm:$0xf]
    %v68 = vunpack.c.l.bf16 %v66
    %v69 = vunpack.c.l.bf16 %v67
    %v70 = vlaneseq
    %v71 = vshrl.u32 %v70, 7
    %v72 = vadd.s32 %v71, 8
    %v73 = vlaneseq
    %v74 = vand.u32 %v73, 127
    %vm75 = vcmp.lt.s32.totalorder %v74, 0
    %v76 = vsub.s32 0, %v74
    %v77 = vsel %vm75, %v76, %v74
    %v78 = vshrl.u32 %v77, 4
    %v79 = vand.u32 %v77, 15
    %v80 = vsub.s32 0, %v79
    %v81 = vsel %vm75, %v80, %v79
    %vm82 = vcmp.ne.s32.totalorder %v81, 0
    %vm83 = vcmp.lt.s32.totalorder %v81, 0
    %vm84 = vmand %vm83, %vm82
    %v85 = vadd.s32 %v81, 16
    %v86 = vsel %vm84, %v85, %v81
    %vm87 = vcmp.eq.s32.totalorder %v71, 0
    %vm88 = vcmp.eq.s32.totalorder %v72, 0
    %vm89 = vcmp.eq.s32.totalorder %v71, 15
    %vm90 = vcmp.eq.s32.totalorder %v72, 15
    %vm91 = vmor %vm87, %vm89
    %vm92 = vmor %vm88, %vm90
    %vm93 = vcmp.eq.s32.totalorder %v71, 1
    %vm94 = vcmp.eq.s32.totalorder %v72, 1
    %vm95 = vcmp.eq.s32.totalorder %v71, 14
    %vm96 = vcmp.eq.s32.totalorder %v72, 14
    %vm97 = vmor %vm93, %vm95
    %vm98 = vmor %vm94, %vm96
    %vm99 = vcmp.eq.s32.totalorder %v86, 0
    %vm100 = vcmp.eq.s32.totalorder %v86, 15
    %vm101 = vmor %vm99, %vm100
    %vm102 = vcmp.eq.s32.totalorder %v86, 1
    %vm103 = vcmp.eq.s32.totalorder %v86, 14
    %vm104 = vmor %vm102, %vm103
    %v105 = vrot.slane %v62, 7
    %v106 = vrot.slane %v63, 7
    %vm107 = vcmp.lt.s32.totalorder %v71, 1
    %v108 = vsel %vm107, %v105, %v106
    %v109 = vsel %vm107, %v106, %v105
    %v110 = vrot.slane %v62, 1
    %v111 = vrot.slane %v63, 1
    %vm112 = vcmp.lt.s32.totalorder %v71, 7
    %v113 = vsel %vm112, %v110, %v111
    %v114 = vsel %vm112, %v111, %v110
    %v115 = vsel %vm97, %v62, 0.0
    %v116 = vsel %vm98, %v63, 0.0
    %v117 = vrot.slane %v115, 7
    %v118 = vrot.slane %v116, 7
    %v119 = vsel %vm107, %v117, %v118
    %v120 = vsel %vm107, %v118, %v117
    %v121 = vrot.slane %v115, 1
    %v122 = vrot.slane %v116, 1
    %v123 = vsel %vm112, %v121, %v122
    %v124 = vsel %vm112, %v122, %v121
    %v125 = vadd.f32 %v120, %v123
    %v126 = vadd.f32 %v119, %v124
    %v127 = vmul.f32 %v125, 2.0
    %v128 = vmul.f32 %v126, 2.0
    %v129 = vadd.f32 %v109, %v113
    %v130 = vadd.f32 %v108, %v114
    %v131 = vsel %vm91, %v127, %v129
    %v132 = vsel %vm92, %v128, %v130
    %v133 = vadd.f32 %v62, %v131
    %v134 = vadd.f32 %v63, %v132
    %135 = vrot.lane.b32.xlu0 %v133, 1
    %v136 = vpop.permute.xlu0 %135
    %137 = vrot.lane.b32.xlu0 %v134, 1
    %v138 = vpop.permute.xlu0 %137
    %139 = vrot.lane.b32.xlu0 %v133, 127
    %v140 = vpop.permute.xlu0 %139
    %141 = vrot.lane.b32.xlu0 %v134, 127
    %v142 = vpop.permute.xlu0 %141
    %v143 = vsel %vm104, %v133, 0.0
    %v144 = vsel %vm104, %v134, 0.0
    %145 = vrot.lane.b32.xlu0 %v143, 1
    %v146 = vpop.permute.xlu0 %145
    %147 = vrot.lane.b32.xlu0 %v144, 1
    %v148 = vpop.permute.xlu0 %147
    %149 = vrot.lane.b32.xlu0 %v143, 127
    %v150 = vpop.permute.xlu0 %149
    %151 = vrot.lane.b32.xlu0 %v144, 127
    %v152 = vpop.permute.xlu0 %151
    %v153 = vadd.f32 %v146, %v150
    %v154 = vadd.f32 %v148, %v152
    %v155 = vmul.f32 %v153, 2.0
    %v156 = vmul.f32 %v154, 2.0
    %v157 = vadd.f32 %v136, %v140
    %v158 = vadd.f32 %v138, %v142
    %v159 = vsel %vm101, %v155, %v157
    %v160 = vsel %vm101, %v156, %v158
    %v161 = vadd.f32 %v133, %v159
    %v162 = vadd.f32 %v134, %v160
    %v163 = vmul.f32 %v161, 0.11111111
    %v164 = vmul.f32 %v162, 0.11111111
    %v165 = vrot.slane %v64, 7
    %v166 = vrot.slane %v65, 7
    %v167 = vsel %vm107, %v165, %v166
    %v168 = vsel %vm107, %v166, %v165
    %v169 = vrot.slane %v64, 1
    %v170 = vrot.slane %v65, 1
    %v171 = vsel %vm112, %v169, %v170
    %v172 = vsel %vm112, %v170, %v169
    %v173 = vsel %vm97, %v64, 0.0
    %v174 = vsel %vm98, %v65, 0.0
    %v175 = vrot.slane %v173, 7
    %v176 = vrot.slane %v174, 7
    %v177 = vsel %vm107, %v175, %v176
    %v178 = vsel %vm107, %v176, %v175
    %v179 = vrot.slane %v173, 1
    %v180 = vrot.slane %v174, 1
    %v181 = vsel %vm112, %v179, %v180
    %v182 = vsel %vm112, %v180, %v179
    %v183 = vadd.f32 %v178, %v181
    %v184 = vadd.f32 %v177, %v182
    %v185 = vmul.f32 %v183, 2.0
    %v186 = vmul.f32 %v184, 2.0
    %v187 = vadd.f32 %v168, %v171
    %v188 = vadd.f32 %v167, %v172
    %v189 = vsel %vm91, %v185, %v187
    %v190 = vsel %vm92, %v186, %v188
    %v191 = vadd.f32 %v64, %v189
    %v192 = vadd.f32 %v65, %v190
    %193 = vrot.lane.b32.xlu0 %v191, 1
    %v194 = vpop.permute.xlu0 %193
    %195 = vrot.lane.b32.xlu0 %v192, 1
    %v196 = vpop.permute.xlu0 %195
    %197 = vrot.lane.b32.xlu0 %v191, 127
    %v198 = vpop.permute.xlu0 %197
    %199 = vrot.lane.b32.xlu0 %v192, 127
    %v200 = vpop.permute.xlu0 %199
    %v201 = vsel %vm104, %v191, 0.0
    %v202 = vsel %vm104, %v192, 0.0
    %203 = vrot.lane.b32.xlu0 %v201, 1
    %v204 = vpop.permute.xlu0 %203
    %205 = vrot.lane.b32.xlu0 %v202, 1
    %v206 = vpop.permute.xlu0 %205
    %207 = vrot.lane.b32.xlu0 %v201, 127
    %v208 = vpop.permute.xlu0 %207
    %209 = vrot.lane.b32.xlu0 %v202, 127
    %v210 = vpop.permute.xlu0 %209
    %v211 = vadd.f32 %v204, %v208
    %v212 = vadd.f32 %v206, %v210
    %v213 = vmul.f32 %v211, 2.0
    %v214 = vmul.f32 %v212, 2.0
    %v215 = vadd.f32 %v194, %v198
    %v216 = vadd.f32 %v196, %v200
    %v217 = vsel %vm101, %v213, %v215
    %v218 = vsel %vm101, %v214, %v216
    %v219 = vadd.f32 %v191, %v217
    %v220 = vadd.f32 %v192, %v218
    %v221 = vmul.f32 %v219, 0.11111111
    %v222 = vmul.f32 %v220, 0.11111111
    %v223 = vmul.f32 %v62, %v62
    %v224 = vmul.f32 %v63, %v63
    %v225 = vrot.slane %v223, 7
    %v226 = vrot.slane %v224, 7
    %v227 = vsel %vm107, %v225, %v226
    %v228 = vsel %vm107, %v226, %v225
    %v229 = vrot.slane %v223, 1
    %v230 = vrot.slane %v224, 1
    %v231 = vsel %vm112, %v229, %v230
    %v232 = vsel %vm112, %v230, %v229
    %v233 = vsel %vm97, %v223, 0.0
    %v234 = vsel %vm98, %v224, 0.0
    %v235 = vrot.slane %v233, 7
    %v236 = vrot.slane %v234, 7
    %v237 = vsel %vm107, %v235, %v236
    %v238 = vsel %vm107, %v236, %v235
    %v239 = vrot.slane %v233, 1
    %v240 = vrot.slane %v234, 1
    %v241 = vsel %vm112, %v239, %v240
    %v242 = vsel %vm112, %v240, %v239
    %v243 = vadd.f32 %v238, %v241
    %v244 = vadd.f32 %v237, %v242
    %v245 = vmul.f32 %v243, 2.0
    %v246 = vmul.f32 %v244, 2.0
    %v247 = vadd.f32 %v228, %v231
    %v248 = vadd.f32 %v227, %v232
    %v249 = vsel %vm91, %v245, %v247
    %v250 = vsel %vm92, %v246, %v248
    %v251 = vadd.f32 %v223, %v249
    %v252 = vadd.f32 %v224, %v250
    %253 = vrot.lane.b32.xlu0 %v251, 1
    %v254 = vpop.permute.xlu0 %253
    %255 = vrot.lane.b32.xlu0 %v252, 1
    %v256 = vpop.permute.xlu0 %255
    %257 = vrot.lane.b32.xlu0 %v251, 127
    %v258 = vpop.permute.xlu0 %257
    %259 = vrot.lane.b32.xlu0 %v252, 127
    %v260 = vpop.permute.xlu0 %259
    %v261 = vsel %vm104, %v251, 0.0
    %v262 = vsel %vm104, %v252, 0.0
    %263 = vrot.lane.b32.xlu0 %v261, 1
    %v264 = vpop.permute.xlu0 %263
    %265 = vrot.lane.b32.xlu0 %v262, 1
    %v266 = vpop.permute.xlu0 %265
    %267 = vrot.lane.b32.xlu0 %v261, 127
    %v268 = vpop.permute.xlu0 %267
    %269 = vrot.lane.b32.xlu0 %v262, 127
    %v270 = vpop.permute.xlu0 %269
    %v271 = vadd.f32 %v264, %v268
    %v272 = vadd.f32 %v266, %v270
    %v273 = vmul.f32 %v271, 2.0
    %v274 = vmul.f32 %v272, 2.0
    %v275 = vadd.f32 %v254, %v258
    %v276 = vadd.f32 %v256, %v260
    %v277 = vsel %vm101, %v273, %v275
    %v278 = vsel %vm101, %v274, %v276
    %v279 = vadd.f32 %v251, %v277
    %v280 = vadd.f32 %v252, %v278
    %v281 = vmul.f32 %v279, 0.11111111
    %v282 = vmul.f32 %v280, 0.11111111
    %v283 = vmul.f32 %v163, %v163
    %v284 = vmul.f32 %v164, %v164
    %v285 = vsub.f32 %v281, %v283
    %v286 = vsub.f32 %v282, %v284
    %v287 = vmul.f32 %v64, %v64
    %v288 = vmul.f32 %v65, %v65
    %v289 = vrot.slane %v287, 7
    %v290 = vrot.slane %v288, 7
    %v291 = vsel %vm107, %v289, %v290
    %v292 = vsel %vm107, %v290, %v289
    %v293 = vrot.slane %v287, 1
    %v294 = vrot.slane %v288, 1
    %v295 = vsel %vm112, %v293, %v294
    %v296 = vsel %vm112, %v294, %v293
    %v297 = vsel %vm97, %v287, 0.0
    %v298 = vsel %vm98, %v288, 0.0
    %v299 = vrot.slane %v297, 7
    %v300 = vrot.slane %v298, 7
    %v301 = vsel %vm107, %v299, %v300
    %v302 = vsel %vm107, %v300, %v299
    %v303 = vrot.slane %v297, 1
    %v304 = vrot.slane %v298, 1
    %v305 = vsel %vm112, %v303, %v304
    %v306 = vsel %vm112, %v304, %v303
    %v307 = vadd.f32 %v302, %v305
    %v308 = vadd.f32 %v301, %v306
    %v309 = vmul.f32 %v307, 2.0
    %v310 = vmul.f32 %v308, 2.0
    %v311 = vadd.f32 %v292, %v295
    %v312 = vadd.f32 %v291, %v296
    %v313 = vsel %vm91, %v309, %v311
    %v314 = vsel %vm92, %v310, %v312
    %v315 = vadd.f32 %v287, %v313
    %v316 = vadd.f32 %v288, %v314
    %317 = vrot.lane.b32.xlu0 %v315, 1
    %v318 = vpop.permute.xlu0 %317
    %319 = vrot.lane.b32.xlu0 %v316, 1
    %v320 = vpop.permute.xlu0 %319
    %321 = vrot.lane.b32.xlu0 %v315, 127
    %v322 = vpop.permute.xlu0 %321
    %323 = vrot.lane.b32.xlu0 %v316, 127
    %v324 = vpop.permute.xlu0 %323
    %v325 = vsel %vm104, %v315, 0.0
    %v326 = vsel %vm104, %v316, 0.0
    %327 = vrot.lane.b32.xlu0 %v325, 1
    %v328 = vpop.permute.xlu0 %327
    %329 = vrot.lane.b32.xlu0 %v326, 1
    %v330 = vpop.permute.xlu0 %329
    %331 = vrot.lane.b32.xlu0 %v325, 127
    %v332 = vpop.permute.xlu0 %331
    %333 = vrot.lane.b32.xlu0 %v326, 127
    %v334 = vpop.permute.xlu0 %333
    %v335 = vadd.f32 %v328, %v332
    %v336 = vadd.f32 %v330, %v334
    %v337 = vmul.f32 %v335, 2.0
    %v338 = vmul.f32 %v336, 2.0
    %v339 = vadd.f32 %v318, %v322
    %v340 = vadd.f32 %v320, %v324
    %v341 = vsel %vm101, %v337, %v339
    %v342 = vsel %vm101, %v338, %v340
    %v343 = vadd.f32 %v315, %v341
    %v344 = vadd.f32 %v316, %v342
    %v345 = vmul.f32 %v343, 0.11111111
    %v346 = vmul.f32 %v344, 0.11111111
    %v347 = vmul.f32 %v221, %v221
    %v348 = vmul.f32 %v222, %v222
    %v349 = vsub.f32 %v345, %v347
    %v350 = vsub.f32 %v346, %v348
    %v351 = vmul.f32 %v62, %v64
    %v352 = vmul.f32 %v63, %v65
    %v353 = vrot.slane %v351, 7
    %v354 = vrot.slane %v352, 7
    %v355 = vsel %vm107, %v353, %v354
    %v356 = vsel %vm107, %v354, %v353
    %v357 = vrot.slane %v351, 1
    %v358 = vrot.slane %v352, 1
    %v359 = vsel %vm112, %v357, %v358
    %v360 = vsel %vm112, %v358, %v357
    %v361 = vsel %vm97, %v351, 0.0
    %v362 = vsel %vm98, %v352, 0.0
    %v363 = vrot.slane %v361, 7
    %v364 = vrot.slane %v362, 7
    %v365 = vsel %vm107, %v363, %v364
    %v366 = vsel %vm107, %v364, %v363
    %v367 = vrot.slane %v361, 1
    %v368 = vrot.slane %v362, 1
    %v369 = vsel %vm112, %v367, %v368
    %v370 = vsel %vm112, %v368, %v367
    %v371 = vadd.f32 %v366, %v369
    %v372 = vadd.f32 %v365, %v370
    %v373 = vmul.f32 %v371, 2.0
    %v374 = vmul.f32 %v372, 2.0
    %v375 = vadd.f32 %v356, %v359
    %v376 = vadd.f32 %v355, %v360
    %v377 = vsel %vm91, %v373, %v375
    %v378 = vsel %vm92, %v374, %v376
    %v379 = vadd.f32 %v351, %v377
    %v380 = vadd.f32 %v352, %v378
    %381 = vrot.lane.b32.xlu0 %v379, 1
    %v382 = vpop.permute.xlu0 %381
    %383 = vrot.lane.b32.xlu0 %v380, 1
    %v384 = vpop.permute.xlu0 %383
    %385 = vrot.lane.b32.xlu0 %v379, 127
    %v386 = vpop.permute.xlu0 %385
    %387 = vrot.lane.b32.xlu0 %v380, 127
    %v388 = vpop.permute.xlu0 %387
    %v389 = vsel %vm104, %v379, 0.0
    %v390 = vsel %vm104, %v380, 0.0
    %391 = vrot.lane.b32.xlu0 %v389, 1
    %v392 = vpop.permute.xlu0 %391
    %393 = vrot.lane.b32.xlu0 %v390, 1
    %v394 = vpop.permute.xlu0 %393
    %395 = vrot.lane.b32.xlu0 %v389, 127
    %v396 = vpop.permute.xlu0 %395
    %397 = vrot.lane.b32.xlu0 %v390, 127
    %v398 = vpop.permute.xlu0 %397
    %v399 = vadd.f32 %v392, %v396
    %v400 = vadd.f32 %v394, %v398
    %v401 = vmul.f32 %v399, 2.0
    %v402 = vmul.f32 %v400, 2.0
    %v403 = vadd.f32 %v382, %v386
    %v404 = vadd.f32 %v384, %v388
    %v405 = vsel %vm101, %v401, %v403
    %v406 = vsel %vm101, %v402, %v404
    %v407 = vadd.f32 %v379, %v405
    %v408 = vadd.f32 %v380, %v406
    %v409 = vmul.f32 %v407, 0.11111111
    %v410 = vmul.f32 %v408, 0.11111111
    %v411 = vmul.f32 %v163, %v221
    %v412 = vmul.f32 %v164, %v222
    %v413 = vsub.f32 %v409, %v411
    %v414 = vsub.f32 %v410, %v412
    %v415 = vmul.f32 %v163, 2.0
    %v416 = vmul.f32 %v164, 2.0
    %v417 = vmul.f32 %v415, %v221
    %v418 = vmul.f32 %v416, %v222
    %v419 = vadd.f32 %v417, 0.0001
    %v420 = vadd.f32 %v418, 0.0001
    %v421 = vmul.f32 %v413, 2.0
    %v422 = vmul.f32 %v414, 2.0
    %v423 = vadd.f32 %v421, 0.0009
    %v424 = vadd.f32 %v422, 0.0009
    %v425 = vmul.f32 %v419, %v423
    %v426 = vmul.f32 %v420, %v424
    %v427 = vadd.f32 %v283, %v347
    %v428 = vadd.f32 %v284, %v348
    %v429 = vadd.f32 %v427, 0.0001
    %v430 = vadd.f32 %v428, 0.0001
    %v431 = vadd.f32 %v285, %v349
    %v432 = vadd.f32 %v286, %v350
    %v433 = vadd.f32 %v431, 0.0009
    %v434 = vadd.f32 %v432, 0.0009
    %v435 = vmul.f32 %v429, %v433
    %v436 = vmul.f32 %v430, %v434
    %v437 = vrcp.pop %v435
    %v438 = vrcp.pop %v436
    %v439 = vmul.f32 %v425, %v437
    %v440 = vmul.f32 %v426, %v438
    %v441 = vsub.f32 1.0, %v439
    %v442 = vsub.f32 1.0, %v440
    %v443 = vmul.f32 %v441, 0.5
    %v444 = vmul.f32 %v442, 0.5
    %v445 = vmax.f32 %v443, 0.0
    %v446 = vmax.f32 %v444, 0.0
    %v447 = vmin.f32 %v445, 1.0
    %v448 = vmin.f32 %v446, 1.0
    %v449 = vld [vmem:[#allocation2] sm:$0xff]
    %v450 = vld [vmem:[#allocation2 + $0x8] sm:$0xff]
    %v451 = vmul.f32 %v447, %v68
    %v452 = vmul.f32 %v448, %v69
    %v453 = vadd.f32 %v449, %v451
    %v454 = vadd.f32 %v450, %v452
    %455 = vst [vmem:[#allocation2] sm:$0xff] %v453
    %456 = vst [vmem:[#allocation2 + $0x8] sm:$0xff] %v454
    // Predicated region
    $region30: #{tpu_custom_call.1} parent=1 // pred_check
      %p457 = pneg %p56
    $region31: #{tpu_custom_call.1} parent=1 // pred_check_branch
      %459 = sbr.rel (%p457) target = $region33
    $region32: #{tpu_custom_call.1} parent=1 // pred_region
      %v460 = vld [vmem:[#allocation2] sm:$0xff]
      %v461 = vld [vmem:[#allocation2 + $0x8] sm:$0xff]
      %v462 = vadd.f32 %v460, %v461
      %463 = vadd.xlane.f32.xlu0 %v462
      %v464 = vpop.xlane.xlu0 %463
      %v465 = vrot.slane %v464, 4
      %v466 = vadd.f32 %v464, %v465
      %v467 = vrot.slane %v466, 2
      %v468 = vadd.f32 %v466, %v467
      %v469 = vrot.slane %v468, 1
      %v470 = vadd.f32 %v468, %v469
      %s471 = vtos %v470
      %v472 = vstv %s471
      %vm473 = vcmask 0
      %474 = vst.msk [vmem:[#allocation9] sm:$0x1] %vm473, %v472
    $region33: #{tpu_custom_call.1} parent=1 // pred_fallthru
      _
    // Predicated region
    $region34: #{tpu_custom_call.1} parent=1 // pred_check
      _
    $region35: #{tpu_custom_call.1} parent=1 // pred_check_branch
      %476 = sbr.rel (0) target = $region37
    $region36: #{tpu_custom_call.1} parent=1 // pred_region
      %s478 = ssub.s32 16, 16
      %479 = vsyncadd [#allocation5], %s478
      %s481 = sshll.u32 [#allocation9], 4
      %s482 = int_to_ptr.vmem [resolvable:$true] %s481
      %484 = dma.vmem_to_hbm [thread:$0]  %s482, 16, %s3, [#allocation5]
    $region37: #{tpu_custom_call.1} parent=1 // pred_fallthru
      _
    // Predicated region
    $region38: #{tpu_custom_call.1} parent=1 // pred_check
      _
    $region39: #{tpu_custom_call.1} parent=1 // pred_check_branch
      %486 = sbr.rel (0) target = $region41
    $region40: #{tpu_custom_call.1} parent=1 // pred_region
      %487 = dma.done [#allocation5], 16
    $region41: #{tpu_custom_call.1} parent=1 // pred_fallthru
      _
    %488 = vsyncpa [#allocation4], 1
    %489 = vsyncpa [#allocation7], 1
    %490 = vsyncpa [#allocation5], 1

</llo_original>
